<compile_context>
chip_gen: v6e
topology: v6e:2x2x1
jax: 0.10.0
libtpu: 0.0.40
codegen_flags: <defaults>
</compile_context>

<pallas_src>
import jax
import jax.numpy as jnp
from jax import lax
from jax.experimental import pallas as pl
from jax.experimental.pallas import tpu as pltpu


def ffn_kernel(x_ref, w1_ref, b1_ref, w2_ref, b2_ref, o_ref, acc_ref):
    k = pl.program_id(1)

    @pl.when(k == 0)
    def _():
        # Fold b2 into the accumulator init (removes a (tm, E) epilogue add).
        acc_ref[...] = jnp.broadcast_to(
            b2_ref[...].astype(jnp.float32), acc_ref.shape)

    # First projection on this hidden chunk: bf16 x bf16 -> f32 on the MXU.
    h = jnp.dot(x_ref[...], w1_ref[...], preferred_element_type=jnp.float32)
    h = h + b1_ref[...].astype(jnp.float32)          # (tm, th) + (1, th)
    # Exact (erf-based) GELU in f32, matching PyTorch nn.GELU() default.
    h = 0.5 * h * (1.0 + lax.erf(h * jnp.float32(0.7071067811865476)))
    # TODO(synk): dropout skipped (eval-mode identity); no RNG applied here.
    # Second projection: cast the activation to bf16 for the MXU, accumulate
    # the partial (tm, E) result into the f32 scratch.
    acc_ref[...] += jnp.dot(h.astype(jnp.bfloat16), w2_ref[...],
                            preferred_element_type=jnp.float32)

    @pl.when(k == pl.num_programs(1) - 1)
    def _():
        o_ref[...] = acc_ref[...].astype(o_ref.dtype)


def feedforward_pallas(x, w1, b1, w2, b2, *, tm=256, th=512):
    """x: (N, E); w1: (E, H); b1: (1, H); w2: (H, E); b2: (1, E)."""
    N, E = x.shape
    H = w1.shape[1]
    out_dtype = x.dtype

    # ---- Row tiling: large tiles for big N, shrink (multiple of 16) for tiny N.
    tm = max(16, min(tm, pl.cdiv(N, 16) * 16))
    Np = pl.cdiv(N, tm) * tm

    # ---- Hidden-chunk tiling: multiple of 128 that divides the padded H.
    Hp = pl.cdiv(H, 128) * 128
    th = max(128, (min(th, Hp) // 128) * 128)
    while Hp % th != 0:
        th -= 128

    # ---- Zero-pad rows / hidden dim (padding contributes nothing to real rows,
    #      padded output rows are sliced off below).
    if Np != N:
        x = jnp.pad(x, ((0, Np - N), (0, 0)))
    if Hp != H:
        w1 = jnp.pad(w1, ((0, 0), (0, Hp - H)))
        b1 = jnp.pad(b1, ((0, 0), (0, Hp - H)))
        w2 = jnp.pad(w2, ((0, Hp - H), (0, 0)))

    # ---- bf16 operands for the MXU; biases stay f32 (f32 accumulation path).
    xb = x.astype(jnp.bfloat16)
    w1b = w1.astype(jnp.bfloat16)
    w2b = w2.astype(jnp.bfloat16)
    b1f = b1.astype(jnp.float32)
    b2f = b2.astype(jnp.float32)

    grid = (Np // tm, Hp // th)

    cost = pl.CostEstimate(
        flops=4 * Np * E * Hp,                       # two matmuls
        transcendentals=Np * Hp,                     # GELU
        bytes_accessed=(xb.size * 2 + w1b.size * 2 + w2b.size * 2
                        + b1f.size * 4 + b2f.size * 4 + Np * E * 4),
    )

    out = pl.pallas_call(
        ffn_kernel,
        out_shape=jax.ShapeDtypeStruct((Np, E), out_dtype),
        grid_spec=pltpu.PrefetchScalarGridSpec(
            num_scalar_prefetch=0,
            grid=grid,
            in_specs=[
                pl.BlockSpec((tm, E), lambda i, k: (i, 0)),   # x row tile
                pl.BlockSpec((E, th), lambda i, k: (0, k)),   # W1 hidden chunk
                pl.BlockSpec((1, th), lambda i, k: (0, k)),   # b1 hidden chunk
                pl.BlockSpec((th, E), lambda i, k: (k, 0)),   # W2 hidden chunk
                pl.BlockSpec((1, E), lambda i, k: (0, 0)),    # b2 (whole)
            ],
            out_specs=pl.BlockSpec((tm, E), lambda i, k: (i, 0)),
            scratch_shapes=[pltpu.VMEM((tm, E), jnp.float32)],
        ),
        compiler_params=pltpu.CompilerParams(
            dimension_semantics=("parallel", "arbitrary")),
        cost_estimate=cost,
    )(xb, w1b, b1f, w2b, b2f)
    return out[:N]


def feedforward_ref(x, w1, b1, w2, b2):
    """Precision-matched reference (bf16 matmul operands, f32 accumulation)."""
    xb = x.astype(jnp.bfloat16)
    h = jnp.dot(xb, w1.astype(jnp.bfloat16),
                preferred_element_type=jnp.float32) + b1
    h = 0.5 * h * (1.0 + lax.erf(h * jnp.float32(0.7071067811865476)))
    o = jnp.dot(h.astype(jnp.bfloat16), w2.astype(jnp.bfloat16),
                preferred_element_type=jnp.float32) + b2
    return o


if __name__ == "__main__":
    # Small shapes consistent with the module (embed_dim, ff_hidden_dim scaled down).
    B, S, E, H = 2, 8, 128, 256

    key = jax.random.PRNGKey(0)
    kx, kw1, kb1, kw2, kb2 = jax.random.split(key, 5)

    x = jax.random.normal(kx, (B, S, E), dtype=jnp.float32)
    # Deterministic "Linear"-style init (uniform in +/- 1/sqrt(fan_in)).
    w1 = jax.random.uniform(kw1, (E, H), jnp.float32, -1.0, 1.0) / jnp.sqrt(E)
    b1 = jax.random.uniform(kb1, (1, H), jnp.float32, -1.0, 1.0) / jnp.sqrt(E)
    w2 = jax.random.uniform(kw2, (H, E), jnp.float32, -1.0, 1.0) / jnp.sqrt(H)
    b2 = jax.random.uniform(kb2, (1, E), jnp.float32, -1.0, 1.0) / jnp.sqrt(H)

    x2d = x.reshape(B * S, E)
    out2d = feedforward_pallas(x2d, w1, b1, w2, b2)
    out = out2d.reshape(B, S, E)
    jax.block_until_ready(out)

    # Correctness check against a precision-matched pure-JAX reference.
    ref = feedforward_ref(x2d, w1, b1, w2, b2).reshape(B, S, E)
    assert jnp.allclose(out, ref, atol=2e-3, rtol=2e-3), "mismatch vs reference"

    print("KERNEL_OK")
</pallas_src>

<mosaic_0001>
module attributes {stable_mosaic.version = 11 : i64} {
  func.func @ffn_kernel(%arg0: i32, %arg1: i32, %arg2: memref<16x128xbf16, #tpu.memory_space<vmem>>, %arg3: memref<128x256xbf16, #tpu.memory_space<vmem>>, %arg4: memref<1x256xf32, #tpu.memory_space<vmem>>, %arg5: memref<256x128xbf16, #tpu.memory_space<vmem>>, %arg6: memref<1x128xf32, #tpu.memory_space<vmem>>, %arg7: memref<16x128xf32, #tpu.memory_space<vmem>>, %arg8: memref<16x128xf32, #tpu.memory_space<vmem>>) attributes {dimension_semantics = [#tpu.dimension_semantics<parallel>, #tpu.dimension_semantics<arbitrary>], iteration_bounds = array<i64: 1, 1>, scalar_prefetch = 0 : i64, scratch_operands = 1 : i64, tpu.core_type = #tpu.core_type<tc>, window_params = [{transform_indices = @transform_0, window_bounds = array<i64: 16, 128>}, {transform_indices = @transform_1, window_bounds = array<i64: 128, 256>}, {transform_indices = @transform_2, window_bounds = array<i64: 1, 256>}, {transform_indices = @transform_3, window_bounds = array<i64: 256, 128>}, {pipeline_mode = #tpu.pipeline_mode<synchronous>, transform_indices = @transform_4, window_bounds = array<i64: 1, 128>}, {transform_indices = @transform_5, window_bounds = array<i64: 16, 128>}]} {
    %c0_i32 = arith.constant 0 : i32
    %0 = arith.cmpi eq, %arg1, %c0_i32 : i32
    %1 = arith.extui %0 : i1 to i32
    %c0_i32_0 = arith.constant 0 : i32
    %2 = arith.cmpi ne, %1, %c0_i32_0 : i32
    scf.if %2 {
      %c0_18 = arith.constant 0 : index
      %c0_19 = arith.constant 0 : index
      %26 = vector.load %arg6[%c0_18, %c0_19] : memref<1x128xf32, #tpu.memory_space<vmem>>, vector<1x128xf32>
      %27 = vector.shape_cast %26 : vector<1x128xf32> to vector<1x128xf32>
      %28 = vector.broadcast %27 : vector<1x128xf32> to vector<16x128xf32>
      %c0_20 = arith.constant 0 : index
      %c0_21 = arith.constant 0 : index
      %29 = vector.load %arg8[%c0_20, %c0_21] : memref<16x128xf32, #tpu.memory_space<vmem>>, vector<16x128xf32>
      tpu.vector_store %arg8[%c0_20, %c0_21], %28 {strides = array<i32>} : memref<16x128xf32, #tpu.memory_space<vmem>>, vector<16x128xf32>,
    } else {
    }
    %c0 = arith.constant 0 : index
    %c0_1 = arith.constant 0 : index
    %3 = vector.load %arg2[%c0, %c0_1] : memref<16x128xbf16, #tpu.memory_space<vmem>>, vector<16x128xbf16>
    %c0_2 = arith.constant 0 : index
    %c0_3 = arith.constant 0 : index
    %4 = vector.load %arg3[%c0_2, %c0_3] : memref<128x256xbf16, #tpu.memory_space<vmem>>, vector<128x256xbf16>
    %cst = arith.constant dense<0.000000e+00> : vector<16x256xf32>
    %5 = tpu.matmul %3, %4, %cst {dimension_numbers = #tpu.dot_dimension_numbers<[1], [0], [0], [1], [0, 0, 1, 1], [], []>} : vector<16x128xbf16>, vector<128x256xbf16>, vector<16x256xf32> -> vector<16x256xf32>
    %c0_4 = arith.constant 0 : index
    %c0_5 = arith.constant 0 : index
    %6 = vector.load %arg4[%c0_4, %c0_5] : memref<1x256xf32, #tpu.memory_space<vmem>>, vector<1x256xf32>
    %7 = vector.broadcast %6 : vector<1x256xf32> to vector<16x256xf32>
    %8 = arith.addf %5, %7 : vector<16x256xf32>
    %cst_6 = arith.constant 5.000000e-01 : f32
    %9 = vector.broadcast %cst_6 : f32 to vector<16x256xf32>
    %10 = arith.mulf %9, %8 : vector<16x256xf32>
    %cst_7 = arith.constant 0.707106769 : f32
    %11 = vector.broadcast %cst_7 : f32 to vector<16x256xf32>
    %12 = arith.mulf %8, %11 : vector<16x256xf32>
    %13 = math.erf %12 : vector<16x256xf32>
    %cst_8 = arith.constant 1.000000e+00 : f32
    %14 = vector.broadcast %cst_8 : f32 to vector<16x256xf32>
    %15 = arith.addf %14, %13 : vector<16x256xf32>
    %16 = arith.mulf %10, %15 : vector<16x256xf32>
    %c0_9 = arith.constant 0 : index
    %c0_10 = arith.constant 0 : index
    %17 = vector.load %arg8[%c0_9, %c0_10] : memref<16x128xf32, #tpu.memory_space<vmem>>, vector<16x128xf32>
    %18 = arith.truncf %16 : vector<16x256xf32> to vector<16x256xbf16>
    %c0_11 = arith.constant 0 : index
    %c0_12 = arith.constant 0 : index
    %19 = vector.load %arg5[%c0_11, %c0_12] : memref<256x128xbf16, #tpu.memory_space<vmem>>, vector<256x128xbf16>
    %cst_13 = arith.constant dense<0.000000e+00> : vector<16x128xf32>
    %20 = tpu.matmul %18, %19, %cst_13 {dimension_numbers = #tpu.dot_dimension_numbers<[1], [0], [0], [1], [0, 0, 1, 1], [], []>} : vector<16x256xbf16>, vector<256x128xbf16>, vector<16x128xf32> -> vector<16x128xf32>
    %21 = arith.addf %17, %20 : vector<16x128xf32>
    %c0_14 = arith.constant 0 : index
    %c0_15 = arith.constant 0 : index
    %22 = vector.load %arg8[%c0_14, %c0_15] : memref<16x128xf32, #tpu.memory_space<vmem>>, vector<16x128xf32>
    tpu.vector_store %arg8[%c0_14, %c0_15], %21 {strides = array<i32>} : memref<16x128xf32, #tpu.memory_space<vmem>>, vector<16x128xf32>,
    %c0_i32_16 = arith.constant 0 : i32
    %23 = arith.cmpi eq, %arg1, %c0_i32_16 : i32
    %24 = arith.extui %23 : i1 to i32
    %c0_i32_17 = arith.constant 0 : i32
    %25 = arith.cmpi ne, %24, %c0_i32_17 : i32
    scf.if %25 {
      %c0_18 = arith.constant 0 : index
      %c0_19 = arith.constant 0 : index
      %26 = vector.load %arg8[%c0_18, %c0_19] : memref<16x128xf32, #tpu.memory_space<vmem>>, vector<16x128xf32>
      %c0_20 = arith.constant 0 : index
      %c0_21 = arith.constant 0 : index
      %27 = vector.load %arg7[%c0_20, %c0_21] : memref<16x128xf32, #tpu.memory_space<vmem>>, vector<16x128xf32>
      tpu.vector_store %arg7[%c0_20, %c0_21], %26 {strides = array<i32>} : memref<16x128xf32, #tpu.memory_space<vmem>>, vector<16x128xf32>,
    } else {
    }
    return
  }
  func.func @transform_0(%arg0: i32, %arg1: i32) -> (i32, i32) {
    %c0_i32 = arith.constant 0 : i32
    %c0_i32_0 = arith.constant 0 : i32
    return %arg0, %c0_i32 : i32, i32
  }
  func.func @transform_1(%arg0: i32, %arg1: i32) -> (i32, i32) {
    %c0_i32 = arith.constant 0 : i32
    %c0_i32_0 = arith.constant 0 : i32
    return %c0_i32, %arg1 : i32, i32
  }
  func.func @transform_2(%arg0: i32, %arg1: i32) -> (i32, i32) {
    %c0_i32 = arith.constant 0 : i32
    %c0_i32_0 = arith.constant 0 : i32
    return %c0_i32, %arg1 : i32, i32
  }
  func.func @transform_3(%arg0: i32, %arg1: i32) -> (i32, i32) {
    %c0_i32 = arith.constant 0 : i32
    %c0_i32_0 = arith.constant 0 : i32
    return %arg1, %c0_i32 : i32, i32
  }
  func.func @transform_4(%arg0: i32, %arg1: i32) -> (i32, i32) {
    %c0_i32 = arith.constant 0 : i32
    %c0_i32_0 = arith.constant 0 : i32
    %c0_i32_1 = arith.constant 0 : i32
    return %c0_i32, %c0_i32_0 : i32, i32
  }
  func.func @transform_5(%arg0: i32, %arg1: i32) -> (i32, i32) {
    %c0_i32 = arith.constant 0 : i32
    %c0_i32_0 = arith.constant 0 : i32
    return %arg0, %c0_i32 : i32, i32
  }
}

</mosaic_0001>

<llo_original>
// kernel: tpu_custom_call.1
$region0: #{tpu_custom_call.1}
  #allocation0 [shape = 'u32[]', space=smem, size = 0x4, offset = 0x4, fixed_abs, tag = 'smem constant byte address 0x4 - core index']
  #allocation1 [shape = 'u32[144,128]{1,0:T(1,128)}', space=vmem, size = 0x12000, scoped, tag = 'internal scratch']
  #allocation2 [shape = 'f32[16,128]{1,0:T(8,128)}', space=vmem, size = 0x2000, scoped, tag = 'scratch operand']
  %s0 = inlined_call_operand.hbm [shape: bf16[16,128], index: 0, kind: input, shape index: {}]
  %s1 = inlined_call_operand.hbm [shape: bf16[128,256], index: 1, kind: input, shape index: {}]
  %s2 = inlined_call_operand.vmem [shape: f32[1,256], index: 2, kind: input, shape index: {}]
  %s3 = inlined_call_operand.hbm [shape: bf16[256,128], index: 3, kind: input, shape index: {}]
  %s4 = inlined_call_operand.vmem [shape: f32[1,128], index: 4, kind: input, shape index: {}]
  %s5 = inlined_call_operand.hbm [shape: f32[16,128], index: 5, kind: output, shape index: {}]
  %s6 = sld [smem:[#allocation0]]
  $region50: #{tpu_custom_call.1} parent=0
    _
  %s8 = ssub.s32 1, %s6
  %s9 = scalar_select 0, %s8, %s6
  $region1: #{tpu_custom_call.1} parent=0
    #allocation3 [shape = 'u8[4096]{0}', space=vmem, size = 0x1000, scoped, tag = 'input window, operand 0, single buffered']
    #allocation4 [shape = 's32[1]{0}', space=sflag, size = 0x4, scoped, tag = 'scoped memory for tpu_custom_call.1']
    #allocation5 [shape = 's32[1]{0}', space=sflag, size = 0x4, scoped, tag = 'scoped memory for tpu_custom_call.1']
    #allocation6 [shape = 'u8[65536]{0}', space=vmem, size = 0x10000, scoped, tag = 'input window, operand 1, single buffered']
    #allocation7 [shape = 's32[1]{0}', space=sflag, size = 0x4, scoped, tag = 'scoped memory for tpu_custom_call.1']
    #allocation8 [shape = 'u8[65536]{0}', space=vmem, size = 0x10000, scoped, tag = 'input window, operand 3, single buffered']
    #allocation9 [shape = 'u8[8192]{0}', space=vmem, size = 0x2000, scoped, tag = 'output window, operand 0, single buffered']
    %10 = vsyncpa [#allocation4], 0
    %11 = vsyncpa [#allocation7], 0
    %12 = vsyncpa [#allocation5], 0
    // Predicated region
    $region2: #{tpu_custom_call.1} parent=1 // pred_check
      _
    $region3: #{tpu_custom_call.1} parent=1 // pred_check_branch
      %14 = sbr.rel (0) target = $region5
    $region4: #{tpu_custom_call.1} parent=1 // pred_region
      %s16 = ssub.s32 128, 128
      %17 = vsyncadd [#allocation4], %s16
      %s18 = sshll.u32 [#allocation3], 4
      %s19 = int_to_ptr.vmem [resolvable:$true] %s18
      %24 = dma.hbm_to_vmem [thread:$0]  %s0, 128, %s19, [#allocation4], 64, 64, 4
    $region5: #{tpu_custom_call.1} parent=1 // pred_fallthru
      _
    // Predicated region
    $region6: #{tpu_custom_call.1} parent=1 // pred_check
      _
    $region7: #{tpu_custom_call.1} parent=1 // pred_check_branch
      %26 = sbr.rel (0) target = $region9
    $region8: #{tpu_custom_call.1} parent=1 // pred_region
      %s28 = ssub.s32 2048, 2048
      %29 = vsyncadd [#allocation7], %s28
      %s30 = sshll.u32 [#allocation6], 4
      %s31 = int_to_ptr.vmem [resolvable:$true] %s30
      %36 = dma.hbm_to_vmem [thread:$0]  %s1, 2048, %s31, [#allocation7], 128, 128, 8
    $region9: #{tpu_custom_call.1} parent=1 // pred_fallthru
      _
    // Predicated region
    $region10: #{tpu_custom_call.1} parent=1 // pred_check
      _
    $region11: #{tpu_custom_call.1} parent=1 // pred_check_branch
      %38 = sbr.rel (0) target = $region13
    $region12: #{tpu_custom_call.1} parent=1 // pred_region
      _
    $region13: #{tpu_custom_call.1} parent=1 // pred_fallthru
      _
    // Predicated region
    $region14: #{tpu_custom_call.1} parent=1 // pred_check
      _
    $region15: #{tpu_custom_call.1} parent=1 // pred_check_branch
      %40 = sbr.rel (0) target = $region17
    $region16: #{tpu_custom_call.1} parent=1 // pred_region
      %s42 = ssub.s32 2048, 2048
      %43 = vsyncadd [#allocation7], %s42
      %s44 = sshll.u32 [#allocation8], 4
      %s45 = int_to_ptr.vmem [resolvable:$true] %s44
      %50 = dma.hbm_to_vmem [thread:$0]  %s3, 2048, %s45, [#allocation7], 64, 64, 4
    $region17: #{tpu_custom_call.1} parent=1 // pred_fallthru
      _
    // Predicated region
    $region18: #{tpu_custom_call.1} parent=1 // pred_check
      _
    $region19: #{tpu_custom_call.1} parent=1 // pred_check_branch
      %52 = sbr.rel (0) target = $region21
    $region20: #{tpu_custom_call.1} parent=1 // pred_region
      _
    $region21: #{tpu_custom_call.1} parent=1 // pred_fallthru
      _
    // Predicated region
    $region22: #{tpu_custom_call.1} parent=1 // pred_check
      _
    $region23: #{tpu_custom_call.1} parent=1 // pred_check_branch
      %54 = sbr.rel (0) target = $region25
    $region24: #{tpu_custom_call.1} parent=1 // pred_region
      %55 = dma.done [#allocation4], 128
    $region25: #{tpu_custom_call.1} parent=1 // pred_fallthru
      _
    // Predicated region
    $region26: #{tpu_custom_call.1} parent=1 // pred_check
      _
    $region27: #{tpu_custom_call.1} parent=1 // pred_check_branch
      %57 = sbr.rel (0) target = $region29
    $region28: #{tpu_custom_call.1} parent=1 // pred_region
      %58 = dma.done [#allocation7], 2048
    $region29: #{tpu_custom_call.1} parent=1 // pred_fallthru
      _
    // Predicated region
    $region30: #{tpu_custom_call.1} parent=1 // pred_check
      _
    $region31: #{tpu_custom_call.1} parent=1 // pred_check_branch
      %60 = sbr.rel (0) target = $region33
    $region32: #{tpu_custom_call.1} parent=1 // pred_region
      %61 = dma.done [#allocation7], 2048
    $region33: #{tpu_custom_call.1} parent=1 // pred_fallthru
      _
    %p63 = scmp.eq.s32.totalorder 0, 0
    // Predicated region
    $region34: #{tpu_custom_call.1} parent=1 // pred_check
      %p64 = pneg %p63
    $region35: #{tpu_custom_call.1} parent=1 // pred_check_branch
      %66 = sbr.rel (%p64) target = $region37
    $region36: #{tpu_custom_call.1} parent=1 // pred_region
      %v67 = vld [vmem:[%s4] sm:$0x1]
      %v69 = vlaneseq
      %v70 = vshrl.u32 %v69, 7
      %v71 = vsub.s32 0, %v70
      %v72 = vrot.slane %v67, %v71
      %74 = vst [vmem:[#allocation2] sm:$0xff] %v72
      %75 = vst [vmem:[#allocation2 + $0x8] sm:$0xff] %v72
    $region37: #{tpu_custom_call.1} parent=1 // pred_fallthru
      _
    %v76 = vld [vmem:[#allocation3] sm:$0xf]
    %v77 = vld [vmem:[#allocation3 + $0x4] sm:$0xf]
    %v78 = vld [vmem:[#allocation6] sm:$0xff]
    %v79 = vld [vmem:[#allocation6 + $0x8] sm:$0xff]
    %v80 = vld [vmem:[#allocation6 + $0x10] sm:$0xff]
    %v81 = vld [vmem:[#allocation6 + $0x18] sm:$0xff]
    %v82 = vld [vmem:[#allocation6 + $0x20] sm:$0xff]
    %v83 = vld [vmem:[#allocation6 + $0x28] sm:$0xff]
    %v84 = vld [vmem:[#allocation6 + $0x30] sm:$0xff]
    %v85 = vld [vmem:[#allocation6 + $0x38] sm:$0xff]
    %v86 = vld [vmem:[#allocation6 + $0x40] sm:$0xff]
    %v87 = vld [vmem:[#allocation6 + $0x48] sm:$0xff]
    %v88 = vld [vmem:[#allocation6 + $0x50] sm:$0xff]
    %v89 = vld [vmem:[#allocation6 + $0x58] sm:$0xff]
    %v90 = vld [vmem:[#allocation6 + $0x60] sm:$0xff]
    %v91 = vld [vmem:[#allocation6 + $0x68] sm:$0xff]
    %v92 = vld [vmem:[#allocation6 + $0x70] sm:$0xff]
    %v93 = vld [vmem:[#allocation6 + $0x78] sm:$0xff]
    %v94 = vld [vmem:[%s2] sm:$0x3]
    %v96 = vlaneseq
    %v97 = vshrl.u32 %v96, 7
    %v98 = vsub.s32 0, %v97
    %v99 = vrot.slane %v94, %v98
    %v100 = vlaneseq
    %v101 = vshrl.u32 %v100, 7
    %v102 = vsub.s32 1, %v101
    %v103 = vrot.slane %v94, %v102
    %v108 = vunpack.c.l.b16 %v76
    %v109 = vunpack.c.l.b16 %v77
    %v110 = vpack.c.b16 %v109, %v108
    %v128 = vunpack.c.l.b16 %v78
    %v129 = vunpack.c.h.b16 %v78
    %v130 = vunpack.c.l.b16 %v79
    %v131 = vunpack.c.h.b16 %v79
    %v132 = vunpack.c.l.b16 %v80
    %v133 = vunpack.c.h.b16 %v80
    %v134 = vunpack.c.l.b16 %v81
    %v135 = vunpack.c.h.b16 %v81
    %v136 = vunpack.c.l.b16 %v82
    %v137 = vunpack.c.h.b16 %v82
    %v138 = vunpack.c.l.b16 %v83
    %v139 = vunpack.c.h.b16 %v83
    %v140 = vunpack.c.l.b16 %v84
    %v141 = vunpack.c.h.b16 %v84
    %v142 = vunpack.c.l.b16 %v85
    %v143 = vunpack.c.h.b16 %v85
    %v144 = vunpack.c.l.b16 %v86
    %v145 = vunpack.c.h.b16 %v86
    %v146 = vunpack.c.l.b16 %v87
    %v147 = vunpack.c.h.b16 %v87
    %v148 = vunpack.c.l.b16 %v88
    %v149 = vunpack.c.h.b16 %v88
    %v150 = vunpack.c.l.b16 %v89
    %v151 = vunpack.c.h.b16 %v89
    %v152 = vunpack.c.l.b16 %v90
    %v153 = vunpack.c.h.b16 %v90
    %v154 = vunpack.c.l.b16 %v91
    %v155 = vunpack.c.h.b16 %v91
    %v156 = vunpack.c.l.b16 %v92
    %v157 = vunpack.c.h.b16 %v92
    %v158 = vunpack.c.l.b16 %v93
    %v159 = vunpack.c.h.b16 %v93
    %v160 = vpack.c.b16 %v130, %v128
    %v161 = vpack.c.b16 %v131, %v129
    %v162 = vpack.c.b16 %v134, %v132
    %v163 = vpack.c.b16 %v135, %v133
    %v164 = vpack.c.b16 %v138, %v136
    %v165 = vpack.c.b16 %v139, %v137
    %v166 = vpack.c.b16 %v142, %v140
    %v167 = vpack.c.b16 %v143, %v141
    %v168 = vpack.c.b16 %v146, %v144
    %v169 = vpack.c.b16 %v147, %v145
    %v170 = vpack.c.b16 %v150, %v148
    %v171 = vpack.c.b16 %v151, %v149
    %v172 = vpack.c.b16 %v154, %v152
    %v173 = vpack.c.b16 %v155, %v153
    %v174 = vpack.c.b16 %v158, %v156
    %v175 = vpack.c.b16 %v159, %v157
    %192 = vmatprep.subr.bf16.mxu0 %v175
    %193 = vmatpush1.bf16.msra.mxu0 %v174
    %194 = vmatprep.subr.bf16.mxu0 %v173
    %195 = vmatpush1.bf16.msra.mxu0 %v172
    %196 = vmatprep.subr.bf16.mxu0 %v171
    %197 = vmatpush1.bf16.msra.mxu0 %v170
    %198 = vmatprep.subr.bf16.mxu0 %v169
    %199 = vmatpush1.bf16.msra.mxu0 %v168
    %200 = vmatprep.subr.bf16.mxu0 %v167
    %201 = vmatpush1.bf16.msra.mxu0 %v166
    %202 = vmatprep.subr.bf16.mxu0 %v165
    %203 = vmatpush1.bf16.msra.mxu0 %v164
    %204 = vmatprep.subr.bf16.mxu0 %v163
    %205 = vmatpush1.bf16.msra.mxu0 %v162
    %206 = vmatprep.subr.bf16.mxu0 %v161
    %207 = vmatpush1.bf16.msra.mxu0 %v160
    %208 = vmatprep.subr.bf16.mxu0 0
    %209 = vmatpush2.bf16.msra.mxu0 0
    %210 = vmatprep.subr.bf16.mxu0 0
    %211 = vmatpush2.bf16.msra.mxu0 0
    %212 = vmatprep.subr.bf16.mxu0 0
    %213 = vmatpush2.bf16.msra.mxu0 0
    %214 = vmatprep.subr.bf16.mxu0 0
    %215 = vmatpush2.bf16.msra.mxu0 0
    %216 = vmatprep.subr.bf16.mxu0 0
    %217 = vmatpush2.bf16.msra.mxu0 0
    %218 = vmatprep.subr.bf16.mxu0 0
    %219 = vmatpush2.bf16.msra.mxu0 0
    %220 = vmatprep.subr.bf16.mxu0 0
    %221 = vmatpush2.bf16.msra.mxu0 0
    %222 = vmatprep.subr.bf16.mxu0 0
    %223 = vmatpush2.bf16.msra.mxu0 0
    %224 = vmatprep.mubr.bf16.mxu0 0
    %225 = vmatmul.mubr.bf16.gmra.mxu0 %v110
    %v226 = vpop.f32.mrf.mxu0
    %v227 = vadd.f32 %v99, %v226
    %v228 = vpop.f32.mrf.mxu0
    %v229 = vadd.f32 %v103, %v228
    %v230 = vpop.f32.mrf.mxu0
    %v231 = vadd.f32 %v99, %v230
    %v232 = vpop.f32.mrf.mxu0
    %v233 = vadd.f32 %v103, %v232
    %234 = vdwg.mxu0
    %v235 = vmul.f32 %v227, 0.5
    %v236 = vmul.f32 %v229, 0.5
    %v237 = vmul.f32 %v231, 0.5
    %v238 = vmul.f32 %v233, 0.5
    %v239 = vmul.f32 %v227, 0.70710677
    %v240 = vmul.f32 %v229, 0.70710677
    %v241 = vmul.f32 %v231, 0.70710677
    %v242 = vmul.f32 %v233, 0.70710677
    %v243 = verf.f32.pop %v239
    %v244 = verf.f32.pop %v240
    %v245 = verf.f32.pop %v241
    %v246 = verf.f32.pop %v242
    %v247 = vadd.f32 %v243, 1.0
    %v248 = vadd.f32 %v244, 1.0
    %v249 = vadd.f32 %v245, 1.0
    %v250 = vadd.f32 %v246, 1.0
    %v251 = vmul.f32 %v235, %v247
    %v252 = vmul.f32 %v236, %v248
    %v253 = vmul.f32 %v237, %v249
    %v254 = vmul.f32 %v238, %v250
    %v255 = vld [vmem:[#allocation2] sm:$0xff]
    %v256 = vld [vmem:[#allocation2 + $0x8] sm:$0xff]
    %v257 = vpack.c.bf16 %v253, %v251
    %v258 = vpack.c.bf16 %v254, %v252
    %v259 = vld [vmem:[#allocation8] sm:$0xf]
    %v260 = vld [vmem:[#allocation8 + $0x4] sm:$0xf]
    %v261 = vld [vmem:[#allocation8 + $0x8] sm:$0xf]
    %v262 = vld [vmem:[#allocation8 + $0xc] sm:$0xf]
    %v263 = vld [vmem:[#allocation8 + $0x10] sm:$0xf]
    %v264 = vld [vmem:[#allocation8 + $0x14] sm:$0xf]
    %v265 = vld [vmem:[#allocation8 + $0x18] sm:$0xf]
    %v266 = vld [vmem:[#allocation8 + $0x1c] sm:$0xf]
    %v267 = vld [vmem:[#allocation8 + $0x20] sm:$0xf]
    %v268 = vld [vmem:[#allocation8 + $0x24] sm:$0xf]
    %v269 = vld [vmem:[#allocation8 + $0x28] sm:$0xf]
    %v270 = vld [vmem:[#allocation8 + $0x2c] sm:$0xf]
    %v271 = vld [vmem:[#allocation8 + $0x30] sm:$0xf]
    %v272 = vld [vmem:[#allocation8 + $0x34] sm:$0xf]
    %v273 = vld [vmem:[#allocation8 + $0x38] sm:$0xf]
    %v274 = vld [vmem:[#allocation8 + $0x3c] sm:$0xf]
    %v275 = vld [vmem:[#allocation8 + $0x40] sm:$0xf]
    %v276 = vld [vmem:[#allocation8 + $0x44] sm:$0xf]
    %v277 = vld [vmem:[#allocation8 + $0x48] sm:$0xf]
    %v278 = vld [vmem:[#allocation8 + $0x4c] sm:$0xf]
    %v279 = vld [vmem:[#allocation8 + $0x50] sm:$0xf]
    %v280 = vld [vmem:[#allocation8 + $0x54] sm:$0xf]
    %v281 = vld [vmem:[#allocation8 + $0x58] sm:$0xf]
    %v282 = vld [vmem:[#allocation8 + $0x5c] sm:$0xf]
    %v283 = vld [vmem:[#allocation8 + $0x60] sm:$0xf]
    %v284 = vld [vmem:[#allocation8 + $0x64] sm:$0xf]
    %v285 = vld [vmem:[#allocation8 + $0x68] sm:$0xf]
    %v286 = vld [vmem:[#allocation8 + $0x6c] sm:$0xf]
    %v287 = vld [vmem:[#allocation8 + $0x70] sm:$0xf]
    %v288 = vld [vmem:[#allocation8 + $0x74] sm:$0xf]
    %v289 = vld [vmem:[#allocation8 + $0x78] sm:$0xf]
    %v290 = vld [vmem:[#allocation8 + $0x7c] sm:$0xf]
    %v323 = vunpack.c.l.b16 %v259
    %v324 = vunpack.c.l.b16 %v260
    %v325 = vunpack.c.l.b16 %v261
    %v326 = vunpack.c.l.b16 %v262
    %v327 = vunpack.c.l.b16 %v263
    %v328 = vunpack.c.l.b16 %v264
    %v329 = vunpack.c.l.b16 %v265
    %v330 = vunpack.c.l.b16 %v266
    %v331 = vunpack.c.l.b16 %v267
    %v332 = vunpack.c.l.b16 %v268
    %v333 = vunpack.c.l.b16 %v269
    %v334 = vunpack.c.l.b16 %v270
    %v335 = vunpack.c.l.b16 %v271
    %v336 = vunpack.c.l.b16 %v272
    %v337 = vunpack.c.l.b16 %v273
    %v338 = vunpack.c.l.b16 %v274
    %v339 = vunpack.c.l.b16 %v275
    %v340 = vunpack.c.l.b16 %v276
    %v341 = vunpack.c.l.b16 %v277
    %v342 = vunpack.c.l.b16 %v278
    %v343 = vunpack.c.l.b16 %v279
    %v344 = vunpack.c.l.b16 %v280
    %v345 = vunpack.c.l.b16 %v281
    %v346 = vunpack.c.l.b16 %v282
    %v347 = vunpack.c.l.b16 %v283
    %v348 = vunpack.c.l.b16 %v284
    %v349 = vunpack.c.l.b16 %v285
    %v350 = vunpack.c.l.b16 %v286
    %v351 = vunpack.c.l.b16 %v287
    %v352 = vunpack.c.l.b16 %v288
    %v353 = vunpack.c.l.b16 %v289
    %v354 = vunpack.c.l.b16 %v290
    %v355 = vpack.c.b16 %v324, %v323
    %v356 = vpack.c.b16 %v326, %v325
    %v357 = vpack.c.b16 %v328, %v327
    %v358 = vpack.c.b16 %v330, %v329
    %v359 = vpack.c.b16 %v332, %v331
    %v360 = vpack.c.b16 %v334, %v333
    %v361 = vpack.c.b16 %v336, %v335
    %v362 = vpack.c.b16 %v338, %v337
    %v363 = vpack.c.b16 %v340, %v339
    %v364 = vpack.c.b16 %v342, %v341
    %v365 = vpack.c.b16 %v344, %v343
    %v366 = vpack.c.b16 %v346, %v345
    %v367 = vpack.c.b16 %v348, %v347
    %v368 = vpack.c.b16 %v350, %v349
    %v369 = vpack.c.b16 %v352, %v351
    %v370 = vpack.c.b16 %v354, %v353
    %387 = vmatprep.subr.bf16.mxu0 0
    %388 = vmatpush1.bf16.msra.mxu0 %v362
    %389 = vmatprep.subr.bf16.mxu0 0
    %390 = vmatpush1.bf16.msra.mxu0 %v361
    %391 = vmatprep.subr.bf16.mxu0 0
    %392 = vmatpush1.bf16.msra.mxu0 %v360
    %393 = vmatprep.subr.bf16.mxu0 0
    %394 = vmatpush1.bf16.msra.mxu0 %v359
    %395 = vmatprep.subr.bf16.mxu0 0
    %396 = vmatpush1.bf16.msra.mxu0 %v358
    %397 = vmatprep.subr.bf16.mxu0 0
    %398 = vmatpush1.bf16.msra.mxu0 %v357
    %399 = vmatprep.subr.bf16.mxu0 0
    %400 = vmatpush1.bf16.msra.mxu0 %v356
    %401 = vmatprep.subr.bf16.mxu0 0
    %402 = vmatpush1.bf16.msra.mxu0 %v355
    %403 = vmatprep.subr.bf16.mxu0 0
    %404 = vmatpush2.bf16.msra.mxu0 %v370
    %405 = vmatprep.subr.bf16.mxu0 0
    %406 = vmatpush2.bf16.msra.mxu0 %v369
    %407 = vmatprep.subr.bf16.mxu0 0
    %408 = vmatpush2.bf16.msra.mxu0 %v368
    %409 = vmatprep.subr.bf16.mxu0 0
    %410 = vmatpush2.bf16.msra.mxu0 %v367
    %411 = vmatprep.subr.bf16.mxu0 0
    %412 = vmatpush2.bf16.msra.mxu0 %v366
    %413 = vmatprep.subr.bf16.mxu0 0
    %414 = vmatpush2.bf16.msra.mxu0 %v365
    %415 = vmatprep.subr.bf16.mxu0 0
    %416 = vmatpush2.bf16.msra.mxu0 %v364
    %417 = vmatprep.subr.bf16.mxu0 0
    %418 = vmatpush2.bf16.msra.mxu0 %v363
    %419 = vmatprep.mubr.bf16.mxu0 %v258
    %420 = vmatmul.mubr.bf16.gmra.mxu0 %v257
    %v421 = vpop.f32.mrf.mxu0
    %v422 = vadd.f32 0.0, %v421
    %v423 = vpop.f32.mrf.mxu0
    %v424 = vpop.f32.mrf.mxu0
    %v425 = vadd.f32 0.0, %v424
    %v426 = vpop.f32.mrf.mxu0
    %427 = vdwg.mxu0
    %v428 = vadd.f32 %v255, %v422
    %v429 = vadd.f32 %v256, %v425
    %430 = vst [vmem:[#allocation2] sm:$0xff] %v428
    %431 = vst [vmem:[#allocation2 + $0x8] sm:$0xff] %v429
    // Predicated region
    $region38: #{tpu_custom_call.1} parent=1 // pred_check
      %p432 = pneg %p63
    $region39: #{tpu_custom_call.1} parent=1 // pred_check_branch
      %434 = sbr.rel (%p432) target = $region41
    $region40: #{tpu_custom_call.1} parent=1 // pred_region
      %v435 = vld [vmem:[#allocation2] sm:$0xff]
      %v436 = vld [vmem:[#allocation2 + $0x8] sm:$0xff]
      %437 = vst [vmem:[#allocation9] sm:$0xff] %v435
      %438 = vst [vmem:[#allocation9 + $0x8] sm:$0xff] %v436
    $region41: #{tpu_custom_call.1} parent=1 // pred_fallthru
      _
    // Predicated region
    $region42: #{tpu_custom_call.1} parent=1 // pred_check
      _
    $region43: #{tpu_custom_call.1} parent=1 // pred_check_branch
      %440 = sbr.rel (0) target = $region45
    $region44: #{tpu_custom_call.1} parent=1 // pred_region
      %s442 = ssub.s32 256, 256
      %443 = vsyncadd [#allocation5], %s442
      %s444 = sshll.u32 [#allocation9], 4
      %s445 = int_to_ptr.vmem [resolvable:$true] %s444
      %450 = dma.vmem_to_hbm [thread:$0]  %s445, 256, %s5, [#allocation5], 128, 128, 8
    $region45: #{tpu_custom_call.1} parent=1 // pred_fallthru
      _
    // Predicated region
    $region46: #{tpu_custom_call.1} parent=1 // pred_check
      _
    $region47: #{tpu_custom_call.1} parent=1 // pred_check_branch
      %452 = sbr.rel (0) target = $region49
    $region48: #{tpu_custom_call.1} parent=1 // pred_region
      %453 = dma.done [#allocation5], 256
    $region49: #{tpu_custom_call.1} parent=1 // pred_fallthru
      _
    %454 = vsyncpa [#allocation4], 1
    %455 = vsyncpa [#allocation7], 1
    %456 = vsyncpa [#allocation5], 1

</llo_original>
